<compile_context>
chip_gen: v7x
topology: tpu7x:2x2x1
jax: 0.10.0
libtpu: 0.0.40
codegen_flags: <defaults>
</compile_context>

<pallas_src>
import functools

import jax
import jax.numpy as jnp
from jax.experimental import pallas as pl
from jax.experimental.pallas import tpu as pltpu


def _affine(w, b, h):
    """w: (fan_out, fan_in), b: (fan_out, 1), h: (fan_in, block_n) -> (fan_out, block_n)."""
    fan_out, fan_in = w.shape
    if fan_in <= 4:
        # Skinny-K input layer: MXU would be <1% utilized; unrolled VPU broadcast FMAs.
        out = b
        for k in range(fan_in):
            out = out + w[:, k:k + 1] * h[k:k + 1, :]
        return out
    if fan_out == 1:
        # Single-output last layer: elementwise multiply + sublane reduction (XLU),
        # avoids MXU push/pop latency for a 1-row result.
        return jnp.sum(w.T * h, axis=0, keepdims=True) + b
    # Square-ish hidden layers: MXU matmul, f32 accumulation, full precision.
    return jnp.dot(w, h,
                   preferred_element_type=jnp.float32,
                   precision=jax.lax.Precision.HIGHEST) + b


def _mlp_kernel(n_layers, x_ref, *refs):
    """refs = (w0, b0, w1, b1, ..., w_{L-1}, b_{L-1}, out_ref)."""
    out_ref = refs[-1]
    param_refs = refs[:-1]
    h = x_ref[...]                        # (in_size, block_n), f32
    for layer in range(n_layers):
        w = param_refs[2 * layer][...]
        b = param_refs[2 * layer + 1][...]
        h = _affine(w, b, h)
        if layer != n_layers - 1:         # final (self.out) layer: no activation
            h = jnp.tanh(h)               # EUP transcendental
    out_ref[...] = h.astype(out_ref.dtype)


def _pick_block_n(n, max_block_n):
    """Batch (lane-axis) tile: large enough to amortize the ~0.35us per-step
    pipeline overhead, capped, and aiming for grid >= 2 (v7x megacore)."""
    if n <= 128:
        return max(n, 1)                  # single full-extent block
    half = -(-n // 2)                     # ceil(n / 2) -> at least 2 grid steps
    blk = ((half + 127) // 128) * 128     # round up to a lane multiple
    return min(max_block_n, blk)


def mlp_forward(x, params, *, block_n=None, max_block_n=2048):
    """x: (N, in_size) float32; params: list of (W, b) with W in nn.Linear
    layout (fan_out, fan_in) and b (fan_out,). Returns (N, out_size)."""
    n, in_size = x.shape
    out_size = params[-1][0].shape[0]
    n_layers = len(params)

    if block_n is None:
        block_n = _pick_block_n(n, max_block_n)
    grid_n = pl.cdiv(n, block_n)
    padded_n = grid_n * block_n

    # Batch on the lane axis: feed x transposed, get the output transposed.
    x_t = x.T                             # (in_size, N)
    if padded_n != n:
        x_t = jnp.pad(x_t, ((0, 0), (0, padded_n - n)))

    in_specs = [pl.BlockSpec((in_size, block_n), lambda i: (0, i))]
    flat_params = []
    # Weights/biases are constant across the grid: keep them whole-array
    # resident in VMEM (no per-step pipelining / double buffering).
    resident = pl.BlockSpec(memory_space=pltpu.MemorySpace.VMEM)
    for (w, b) in params:
        fout, _ = w.shape
        in_specs.append(resident)         # weight (fan_out, fan_in)
        in_specs.append(resident)         # bias   (fan_out, 1)
        flat_params.append(w)
        flat_params.append(b.reshape(fout, 1))

    out_spec = pl.BlockSpec((out_size, block_n), lambda i: (0, i))

    kernel = functools.partial(_mlp_kernel, n_layers)

    out_t = pl.pallas_call(
        kernel,
        out_shape=jax.ShapeDtypeStruct((out_size, padded_n), x.dtype),
        grid_spec=pltpu.PrefetchScalarGridSpec(
            num_scalar_prefetch=0,
            grid=(grid_n,),
            in_specs=in_specs,
            out_specs=out_spec,
        ),
        compiler_params=pltpu.CompilerParams(
            dimension_semantics=("parallel",),
            # Explicit budget (v7x: 64 MiB physical / 32 MiB scoped default).
            vmem_limit_bytes=32 * 1024 * 1024,
        ),
    )(x_t, *flat_params)

    if padded_n != n:
        out_t = out_t[:, :n]
    return out_t.T                        # (N, out_size)


def init_params(key, in_size, h_sizes, out_size):
    """Deterministic init matching nn.Linear shapes: W (fan_out, fan_in), b (fan_out,)."""
    sizes = [in_size] + list(h_sizes) + [out_size]
    params = []
    for fin, fout in zip(sizes[:-1], sizes[1:]):
        key, kw, kb = jax.random.split(key, 3)
        bound = 1.0 / jnp.sqrt(fin)
        w = jax.random.uniform(kw, (fout, fin), jnp.float32, -bound, bound)
        b = jax.random.uniform(kb, (fout,), jnp.float32, -bound, bound)
        params.append((w, b))
    return params


def mlp_reference(x, params):
    """Pure-JAX reference (nn.Linear semantics: y = x @ W.T + b)."""
    h = x
    for i, (w, b) in enumerate(params):
        h = jnp.dot(h, w.T, precision=jax.lax.Precision.HIGHEST) + b
        if i != len(params) - 1:
            h = jnp.tanh(h)
    return h


if __name__ == "__main__":
    # Burgers-equation MLP: input (x, t) -> 2 features, two hidden layers, scalar output.
    in_size, h_sizes, out_size = 2, [32, 32], 1
    batch = 256

    key = jax.random.PRNGKey(0)
    key, kx = jax.random.split(key)
    x = jax.random.normal(kx, (batch, in_size), jnp.float32)

    params = init_params(key, in_size, h_sizes, out_size)

    out = mlp_forward(x, params)          # block picked -> 128 lanes, grid = 2
    out = jax.block_until_ready(out)

    ref = mlp_reference(x, params)
    assert out.shape == (batch, out_size)
    assert jnp.allclose(out, ref, atol=1e-4, rtol=1e-4), "mismatch vs reference"

    print("KERNEL_OK")
</pallas_src>

<mosaic_0001>
module attributes {stable_mosaic.version = 11 : i64} {
  func.func @_mlp_kernel(%arg0: i32, %arg1: memref<2x128xf32, #tpu.memory_space<vmem>>, %arg2: memref<32x2xf32, #tpu.memory_space<vmem>>, %arg3: memref<32x1xf32, #tpu.memory_space<vmem>>, %arg4: memref<32x32xf32, #tpu.memory_space<vmem>>, %arg5: memref<32x1xf32, #tpu.memory_space<vmem>>, %arg6: memref<1x32xf32, #tpu.memory_space<vmem>>, %arg7: memref<1x1xf32, #tpu.memory_space<vmem>>, %arg8: memref<1x128xf32, #tpu.memory_space<vmem>>) attributes {dimension_semantics = [#tpu.dimension_semantics<parallel>], iteration_bounds = array<i64: 2>, scalar_prefetch = 0 : i64, scratch_operands = 0 : i64, tpu.core_type = #tpu.core_type<tc>, window_params = [{transform_indices = @transform_0, window_bounds = array<i64: 2, 128>}, {pipeline_mode = #tpu.pipeline_mode<synchronous>, transform_indices = @transform_1, window_bounds = array<i64: 32, 2>}, {pipeline_mode = #tpu.pipeline_mode<synchronous>, transform_indices = @transform_2, window_bounds = array<i64: 32, 1>}, {pipeline_mode = #tpu.pipeline_mode<synchronous>, transform_indices = @transform_3, window_bounds = array<i64: 32, 32>}, {pipeline_mode = #tpu.pipeline_mode<synchronous>, transform_indices = @transform_4, window_bounds = array<i64: 32, 1>}, {pipeline_mode = #tpu.pipeline_mode<synchronous>, transform_indices = @transform_5, window_bounds = array<i64: 1, 32>}, {pipeline_mode = #tpu.pipeline_mode<synchronous>, transform_indices = @transform_6, window_bounds = array<i64: 1, 1>}, {transform_indices = @transform_7, window_bounds = array<i64: 1, 128>}]} {
    %c0 = arith.constant 0 : index
    %c0_0 = arith.constant 0 : index
    %0 = vector.load %arg1[%c0, %c0_0] : memref<2x128xf32, #tpu.memory_space<vmem>>, vector<2x128xf32>
    %c0_1 = arith.constant 0 : index
    %c0_2 = arith.constant 0 : index
    %1 = vector.load %arg2[%c0_1, %c0_2] : memref<32x2xf32, #tpu.memory_space<vmem>>, vector<32x2xf32>
    %c0_3 = arith.constant 0 : index
    %c0_4 = arith.constant 0 : index
    %2 = vector.load %arg3[%c0_3, %c0_4] : memref<32x1xf32, #tpu.memory_space<vmem>>, vector<32x1xf32>
    %3 = vector.extract_strided_slice %1 {offsets = [0, 0], sizes = [32, 1], strides = [1, 1]} : vector<32x2xf32> to vector<32x1xf32>
    %4 = vector.extract_strided_slice %0 {offsets = [0, 0], sizes = [1, 128], strides = [1, 1]} : vector<2x128xf32> to vector<1x128xf32>
    %5 = vector.broadcast %3 : vector<32x1xf32> to vector<32x128xf32>
    %6 = vector.broadcast %4 : vector<1x128xf32> to vector<32x128xf32>
    %7 = arith.mulf %5, %6 : vector<32x128xf32>
    %8 = vector.broadcast %2 : vector<32x1xf32> to vector<32x128xf32>
    %9 = arith.addf %8, %7 : vector<32x128xf32>
    %10 = vector.extract_strided_slice %1 {offsets = [0, 1], sizes = [32, 1], strides = [1, 1]} : vector<32x2xf32> to vector<32x1xf32>
    %11 = vector.extract_strided_slice %0 {offsets = [1, 0], sizes = [1, 128], strides = [1, 1]} : vector<2x128xf32> to vector<1x128xf32>
    %12 = vector.broadcast %10 : vector<32x1xf32> to vector<32x128xf32>
    %13 = vector.broadcast %11 : vector<1x128xf32> to vector<32x128xf32>
    %14 = arith.mulf %12, %13 : vector<32x128xf32>
    %15 = arith.addf %9, %14 : vector<32x128xf32>
    %16 = math.tanh %15 : vector<32x128xf32>
    %c0_5 = arith.constant 0 : index
    %c0_6 = arith.constant 0 : index
    %17 = vector.load %arg4[%c0_5, %c0_6] : memref<32x32xf32, #tpu.memory_space<vmem>>, vector<32x32xf32>
    %c0_7 = arith.constant 0 : index
    %c0_8 = arith.constant 0 : index
    %18 = vector.load %arg5[%c0_7, %c0_8] : memref<32x1xf32, #tpu.memory_space<vmem>>, vector<32x1xf32>
    %cst = arith.constant dense<0.000000e+00> : vector<32x128xf32>
    %19 = tpu.matmul %17, %16, %cst {dimension_numbers = #tpu.dot_dimension_numbers<[1], [0], [0], [1], [0, 0, 1, 1], [], []>, precision = #tpu.contract_precision<fp32>} : vector<32x32xf32>, vector<32x128xf32>, vector<32x128xf32> -> vector<32x128xf32>
    %20 = vector.broadcast %18 : vector<32x1xf32> to vector<32x128xf32>
    %21 = arith.addf %19, %20 : vector<32x128xf32>
    %22 = math.tanh %21 : vector<32x128xf32>
    %c0_9 = arith.constant 0 : index
    %c0_10 = arith.constant 0 : index
    %23 = vector.load %arg6[%c0_9, %c0_10] : memref<1x32xf32, #tpu.memory_space<vmem>>, vector<1x32xf32>
    %c0_11 = arith.constant 0 : index
    %c0_12 = arith.constant 0 : index
    %24 = vector.load %arg7[%c0_11, %c0_12] : memref<1x1xf32, #tpu.memory_space<vmem>>, vector<1x1xf32>
    %25 = tpu.transpose %23, [1, 0] : vector<1x32xf32> -> vector<32x1xf32>
    %26 = vector.broadcast %25 : vector<32x1xf32> to vector<32x128xf32>
    %27 = arith.mulf %26, %22 : vector<32x128xf32>
    %cst_13 = arith.constant dense<0.000000e+00> : vector<128xf32>
    %28 = vector.multi_reduction <add>, %27, %cst_13 [0] : vector<32x128xf32> to vector<128xf32>
    %29 = vector.shape_cast %28 : vector<128xf32> to vector<1x128xf32>
    %30 = vector.broadcast %24 : vector<1x1xf32> to vector<1x128xf32>
    %31 = arith.addf %29, %30 : vector<1x128xf32>
    %c0_14 = arith.constant 0 : index
    %c0_15 = arith.constant 0 : index
    %32 = vector.load %arg8[%c0_14, %c0_15] : memref<1x128xf32, #tpu.memory_space<vmem>>, vector<1x128xf32>
    tpu.vector_store %arg8[%c0_14, %c0_15], %31 {strides = array<i32>} : memref<1x128xf32, #tpu.memory_space<vmem>>, vector<1x128xf32>,
    return
  }
  func.func @transform_0(%arg0: i32) -> (i32, i32) {
    %c0_i32 = arith.constant 0 : i32
    %c0_i32_0 = arith.constant 0 : i32
    return %c0_i32, %arg0 : i32, i32
  }
  func.func @transform_1(%arg0: i32) -> (i32, i32) {
    %c0_i32 = arith.constant 0 : i32
    %c0_i32_0 = arith.constant 0 : i32
    %c0_i32_1 = arith.constant 0 : i32
    return %c0_i32, %c0_i32_0 : i32, i32
  }
  func.func @transform_2(%arg0: i32) -> (i32, i32) {
    %c0_i32 = arith.constant 0 : i32
    %c0_i32_0 = arith.constant 0 : i32
    %c0_i32_1 = arith.constant 0 : i32
    return %c0_i32, %c0_i32_0 : i32, i32
  }
  func.func @transform_3(%arg0: i32) -> (i32, i32) {
    %c0_i32 = arith.constant 0 : i32
    %c0_i32_0 = arith.constant 0 : i32
    %c0_i32_1 = arith.constant 0 : i32
    return %c0_i32, %c0_i32_0 : i32, i32
  }
  func.func @transform_4(%arg0: i32) -> (i32, i32) {
    %c0_i32 = arith.constant 0 : i32
    %c0_i32_0 = arith.constant 0 : i32
    %c0_i32_1 = arith.constant 0 : i32
    return %c0_i32, %c0_i32_0 : i32, i32
  }
  func.func @transform_5(%arg0: i32) -> (i32, i32) {
    %c0_i32 = arith.constant 0 : i32
    %c0_i32_0 = arith.constant 0 : i32
    %c0_i32_1 = arith.constant 0 : i32
    return %c0_i32, %c0_i32_0 : i32, i32
  }
  func.func @transform_6(%arg0: i32) -> (i32, i32) {
    %c0_i32 = arith.constant 0 : i32
    %c0_i32_0 = arith.constant 0 : i32
    %c0_i32_1 = arith.constant 0 : i32
    return %c0_i32, %c0_i32_0 : i32, i32
  }
  func.func @transform_7(%arg0: i32) -> (i32, i32) {
    %c0_i32 = arith.constant 0 : i32
    %c0_i32_0 = arith.constant 0 : i32
    return %c0_i32, %arg0 : i32, i32
  }
}

</mosaic_0001>

<llo_original>
// kernel: tpu_custom_call.1
$region0: #{tpu_custom_call.1}
  #allocation0 [shape = 'u32[]', space=smem, size = 0x4, offset = 0x4, fixed_abs, tag = 'smem constant byte address 0x4 - core index']
  #allocation1 [shape = 'u32[144,128]{1,0:T(1,128)}', space=vmem, size = 0x12000, scoped, tag = 'internal scratch']
  #allocation2 [shape = 'f32[1,1]{1,0:T(1,128)S(1)}', space=vmem, size = 0x200, scoped, tag = 'scoped memory for tpu_custom_call.1']
  %s0 = inlined_call_operand.vmem [shape: f32[2,256], index: 0, kind: input, shape index: {}]
  %s1 = inlined_call_operand.vmem [shape: f32[32,2], index: 1, kind: input, shape index: {}]
  %s2 = inlined_call_operand.vmem [shape: f32[32,1], index: 2, kind: input, shape index: {}]
  %s3 = inlined_call_operand.vmem [shape: f32[32,32], index: 3, kind: input, shape index: {}]
  %s4 = inlined_call_operand.vmem [shape: f32[32,1], index: 4, kind: input, shape index: {}]
  %s5 = inlined_call_operand.vmem [shape: f32[1,32], index: 5, kind: input, shape index: {}]
  %s6 = inlined_call_operand.<no memory space> [shape: f32[1,1], index: 6, kind: input, shape index: {}]
  %s7 = inlined_call_operand.hbm [shape: f32[1,256], index: 7, kind: output, shape index: {}]
  %s8 = sld [smem:[#allocation0]]
  $region61: #{tpu_custom_call.1} parent=0
    _
  %s10 = ssub.s32 1, %s8
  %s11 = scalar_select 0, %s10, %s8
  %v12 = vstv %s6
  %13 = vst [vmem:[#allocation2] sm:$0x1] %v12
  $region1: #{tpu_custom_call.1} parent=0
    #allocation3 [shape = 'u8[1024]{0}', space=vmem, size = 0x400, scoped, tag = 'output window, operand 0']
    #allocation4 [shape = 's32[2]{0}', space=sflag, size = 0x8, scoped, tag = 'scoped memory for tpu_custom_call.1']
    %14 = vsyncpa [#allocation4], 0
    %s15 = scalar_lea.sflag [#allocation4], 1
    %16 = vsyncpa %s15, 0
    loop: start=0, step=1, limit=4
    $region2: #{tpu_custom_call.1} parent=1 // loop_pre_header
      _
    $region3: #{tpu_custom_call.1} parent=1 // loop_header
      %s18 = sphi 0, %s22
      %p19 = scmp.ge.s32.totalorder %s18, 4
      %s28 = sphi 0, %s30
      %s31 = sphi 0, %s28
      %s32 = sphi 0, %s31
      %s48 = sphi 0, %s32
      %s52 = sphi 0, %s52
      %s54 = sphi 0, %s52
      %s55 = sphi 0, %s54
      %s69 = sphi 0, %s55
      %s73 = sphi 0, %s73
      %s75 = sphi 0, %s73
      %s76 = sphi 0, %s75
      %s90 = sphi 0, %s76
      %s94 = sphi 0, %s94
      %s96 = sphi 0, %s94
      %s97 = sphi 0, %s96
      %s111 = sphi 0, %s97
      %s115 = sphi 0, %s115
      %s117 = sphi 0, %s115
      %s118 = sphi 0, %s117
      %s132 = sphi 0, %s118
      %s136 = sphi 0, %s136
      %s138 = sphi 0, %s136
      %s139 = sphi 0, %s138
      %s153 = sphi 0, %s139
      %s157 = sphi 0, %s157
      %s159 = sphi 0, %s157
      %s160 = sphi 0, %s159
      %s174 = sphi 0, %s160
      %s180 = sphi 0, %s182
      %s183 = sphi 0, %s180
      %s184 = sphi 0, %s183
      %s200 = sphi 0, %s184
    $region4: #{tpu_custom_call.1} parent=1 // loop_header_branch
      %21 = sbr.rel (%p19) target = $region8
    $region5: #{tpu_custom_call.1} parent=1 // loop_body
      %s23 = ssub.s32 %s18, 1
      %s24 = ssub.s32 %s18, 2
      %s25 = sadd.s32 %s18, 1
      %s26 = ssub.s32 %s18, %s25
      %p27 = scmp.eq.s32.totalorder %s26, 0
      %s29 = sadd.s32 %s28, 1
      %s30 = scalar_select %p27, %s28, %s29
      %p33 = pneg %p27
      %p34 = scmp.eq.s32.totalorder %s18, 1
      %p35 = por %p33, %p34
      %p36 = scmp.ne.s32.totalorder %s28, %s31
      %p37 = scmp.eq.s32.totalorder %s18, 0
      %p38 = por %p36, %p37
      %p39 = scmp.ne.s32.totalorder %s28, %s31
      %p40 = scmp.eq.s32.totalorder %s23, 1
      %p41 = por %p39, %p40
      %p42 = scmp.ne.s32.totalorder %s31, %s32
      %p43 = scmp.eq.s32.totalorder %s23, 0
      %p44 = por %p42, %p43
      %p45 = scmp.ne.s32.totalorder %s31, %s32
      %p46 = scmp.eq.s32.totalorder %s24, 1
      %p47 = por %p45, %p46
      %p49 = scmp.ne.s32.totalorder %s32, %s48
      %p50 = scmp.eq.s32.totalorder %s24, 0
      %p51 = por %p49, %p50
      %s53 = sadd.s32 %s52, 1
      %p56 = scmp.eq.s32.totalorder %s18, 1
      %p57 = scmp.ne.s32.totalorder %s52, %s54
      %p58 = scmp.eq.s32.totalorder %s18, 0
      %p59 = por %p57, %p58
      %p60 = scmp.ne.s32.totalorder %s52, %s54
      %p61 = scmp.eq.s32.totalorder %s23, 1
      %p62 = por %p60, %p61
      %p63 = scmp.ne.s32.totalorder %s54, %s55
      %p64 = scmp.eq.s32.totalorder %s23, 0
      %p65 = por %p63, %p64
      %p66 = scmp.ne.s32.totalorder %s54, %s55
      %p67 = scmp.eq.s32.totalorder %s24, 1
      %p68 = por %p66, %p67
      %p70 = scmp.ne.s32.totalorder %s55, %s69
      %p71 = scmp.eq.s32.totalorder %s24, 0
      %p72 = por %p70, %p71
      %s74 = sadd.s32 %s73, 1
      %p77 = scmp.eq.s32.totalorder %s18, 1
      %p78 = scmp.ne.s32.totalorder %s73, %s75
      %p79 = scmp.eq.s32.totalorder %s18, 0
      %p80 = por %p78, %p79
      %p81 = scmp.ne.s32.totalorder %s73, %s75
      %p82 = scmp.eq.s32.totalorder %s23, 1
      %p83 = por %p81, %p82
      %p84 = scmp.ne.s32.totalorder %s75, %s76
      %p85 = scmp.eq.s32.totalorder %s23, 0
      %p86 = por %p84, %p85
      %p87 = scmp.ne.s32.totalorder %s75, %s76
      %p88 = scmp.eq.s32.totalorder %s24, 1
      %p89 = por %p87, %p88
      %p91 = scmp.ne.s32.totalorder %s76, %s90
      %p92 = scmp.eq.s32.totalorder %s24, 0
      %p93 = por %p91, %p92
      %s95 = sadd.s32 %s94, 1
      %p98 = scmp.eq.s32.totalorder %s18, 1
      %p99 = scmp.ne.s32.totalorder %s94, %s96
      %p100 = scmp.eq.s32.totalorder %s18, 0
      %p101 = por %p99, %p100
      %p102 = scmp.ne.s32.totalorder %s94, %s96
      %p103 = scmp.eq.s32.totalorder %s23, 1
      %p104 = por %p102, %p103
      %p105 = scmp.ne.s32.totalorder %s96, %s97
      %p106 = scmp.eq.s32.totalorder %s23, 0
      %p107 = por %p105, %p106
      %p108 = scmp.ne.s32.totalorder %s96, %s97
      %p109 = scmp.eq.s32.totalorder %s24, 1
      %p110 = por %p108, %p109
      %p112 = scmp.ne.s32.totalorder %s97, %s111
      %p113 = scmp.eq.s32.totalorder %s24, 0
      %p114 = por %p112, %p113
      %s116 = sadd.s32 %s115, 1
      %p119 = scmp.eq.s32.totalorder %s18, 1
      %p120 = scmp.ne.s32.totalorder %s115, %s117
      %p121 = scmp.eq.s32.totalorder %s18, 0
      %p122 = por %p120, %p121
      %p123 = scmp.ne.s32.totalorder %s115, %s117
      %p124 = scmp.eq.s32.totalorder %s23, 1
      %p125 = por %p123, %p124
      %p126 = scmp.ne.s32.totalorder %s117, %s118
      %p127 = scmp.eq.s32.totalorder %s23, 0
      %p128 = por %p126, %p127
      %p129 = scmp.ne.s32.totalorder %s117, %s118
      %p130 = scmp.eq.s32.totalorder %s24, 1
      %p131 = por %p129, %p130
      %p133 = scmp.ne.s32.totalorder %s118, %s132
      %p134 = scmp.eq.s32.totalorder %s24, 0
      %p135 = por %p133, %p134
      %s137 = sadd.s32 %s136, 1
      %p140 = scmp.eq.s32.totalorder %s18, 1
      %p141 = scmp.ne.s32.totalorder %s136, %s138
      %p142 = scmp.eq.s32.totalorder %s18, 0
      %p143 = por %p141, %p142
      %p144 = scmp.ne.s32.totalorder %s136, %s138
      %p145 = scmp.eq.s32.totalorder %s23, 1
      %p146 = por %p144, %p145
      %p147 = scmp.ne.s32.totalorder %s138, %s139
      %p148 = scmp.eq.s32.totalorder %s23, 0
      %p149 = por %p147, %p148
      %p150 = scmp.ne.s32.totalorder %s138, %s139
      %p151 = scmp.eq.s32.totalorder %s24, 1
      %p152 = por %p150, %p151
      %p154 = scmp.ne.s32.totalorder %s139, %s153
      %p155 = scmp.eq.s32.totalorder %s24, 0
      %p156 = por %p154, %p155
      %s158 = sadd.s32 %s157, 1
      %p161 = scmp.eq.s32.totalorder %s18, 1
      %p162 = scmp.ne.s32.totalorder %s157, %s159
      %p163 = scmp.eq.s32.totalorder %s18, 0
      %p164 = por %p162, %p163
      %p165 = scmp.ne.s32.totalorder %s157, %s159
      %p166 = scmp.eq.s32.totalorder %s23, 1
      %p167 = por %p165, %p166
      %p168 = scmp.ne.s32.totalorder %s159, %s160
      %p169 = scmp.eq.s32.totalorder %s23, 0
      %p170 = por %p168, %p169
      %p171 = scmp.ne.s32.totalorder %s159, %s160
      %p172 = scmp.eq.s32.totalorder %s24, 1
      %p173 = por %p171, %p172
      %p175 = scmp.ne.s32.totalorder %s160, %s174
      %p176 = scmp.eq.s32.totalorder %s24, 0
      %p177 = por %p175, %p176
      %s178 = ssub.s32 %s18, %s25
      %p179 = scmp.eq.s32.totalorder %s178, 0
      %s181 = sadd.s32 %s180, 1
      %s182 = scalar_select %p179, %s180, %s181
      %p185 = pneg %p179
      %p186 = scmp.eq.s32.totalorder %s18, 1
      %p187 = por %p185, %p186
      %p188 = scmp.ne.s32.totalorder %s180, %s183
      %p189 = scmp.eq.s32.totalorder %s18, 0
      %p190 = por %p188, %p189
      %p191 = scmp.ne.s32.totalorder %s180, %s183
      %p192 = scmp.eq.s32.totalorder %s23, 1
      %p193 = por %p191, %p192
      %p194 = scmp.ne.s32.totalorder %s183, %s184
      %p195 = scmp.eq.s32.totalorder %s23, 0
      %p196 = por %p194, %p195
      %p197 = scmp.ne.s32.totalorder %s183, %s184
      %p198 = scmp.eq.s32.totalorder %s24, 1
      %p199 = por %p197, %p198
      %p201 = scmp.ne.s32.totalorder %s184, %s200
      %p202 = scmp.eq.s32.totalorder %s24, 0
      %p203 = por %p201, %p202
      %p204 = scmp.le.s32.totalorder 1, %s18
      %p205 = scmp.lt.s32.totalorder %s18, 3
      %p206 = pnand %p204, %p205
      %p207 = pneg %p206
      // Predicated region
      $region9: #{tpu_custom_call.1} parent=5 // pred_check
        _
      $region10: #{tpu_custom_call.1} parent=5 // pred_check_branch
        %209 = sbr.rel (%p206) target = $region12
      $region11: #{tpu_custom_call.1} parent=5 // pred_region
        %s210 = ssub.s32 %s18, 1
        // Predicated region
        $region13: #{tpu_custom_call.1} parent=11 // pred_check
          %p211 = pneg %p65
        $region14: #{tpu_custom_call.1} parent=11 // pred_check_branch
          %213 = sbr.rel (%p211) target = $region16
        $region15: #{tpu_custom_call.1} parent=11 // pred_region
          _
        $region16: #{tpu_custom_call.1} parent=11 // pred_fallthru
          _
        // Predicated region
        $region17: #{tpu_custom_call.1} parent=11 // pred_check
          %p214 = pneg %p86
        $region18: #{tpu_custom_call.1} parent=11 // pred_check_branch
          %216 = sbr.rel (%p214) target = $region20
        $region19: #{tpu_custom_call.1} parent=11 // pred_region
          _
        $region20: #{tpu_custom_call.1} parent=11 // pred_fallthru
          _
        // Predicated region
        $region21: #{tpu_custom_call.1} parent=11 // pred_check
          %p217 = pneg %p107
        $region22: #{tpu_custom_call.1} parent=11 // pred_check_branch
          %219 = sbr.rel (%p217) target = $region24
        $region23: #{tpu_custom_call.1} parent=11 // pred_region
          _
        $region24: #{tpu_custom_call.1} parent=11 // pred_fallthru
          _
        // Predicated region
        $region25: #{tpu_custom_call.1} parent=11 // pred_check
          %p220 = pneg %p128
        $region26: #{tpu_custom_call.1} parent=11 // pred_check_branch
          %222 = sbr.rel (%p220) target = $region28
        $region27: #{tpu_custom_call.1} parent=11 // pred_region
          _
        $region28: #{tpu_custom_call.1} parent=11 // pred_fallthru
          _
        // Predicated region
        $region29: #{tpu_custom_call.1} parent=11 // pred_check
          %p223 = pneg %p149
        $region30: #{tpu_custom_call.1} parent=11 // pred_check_branch
          %225 = sbr.rel (%p223) target = $region32
        $region31: #{tpu_custom_call.1} parent=11 // pred_region
          _
        $region32: #{tpu_custom_call.1} parent=11 // pred_fallthru
          _
        // Predicated region
        $region33: #{tpu_custom_call.1} parent=11 // pred_check
          %p226 = pneg %p170
        $region34: #{tpu_custom_call.1} parent=11 // pred_check_branch
          %228 = sbr.rel (%p226) target = $region36
        $region35: #{tpu_custom_call.1} parent=11 // pred_region
          _
        $region36: #{tpu_custom_call.1} parent=11 // pred_fallthru
          _
      $region12: #{tpu_custom_call.1} parent=5 // pred_fallthru
        _
      %p229 = scmp.lt.s32.totalorder %s18, 2
      // Predicated region
      $region37: #{tpu_custom_call.1} parent=5 // pred_check
        %p230 = pneg %p229
      $region38: #{tpu_custom_call.1} parent=5 // pred_check_branch
        %232 = sbr.rel (%p230) target = $region40
      $region39: #{tpu_custom_call.1} parent=5 // pred_region
        // Predicated region
        $region41: #{tpu_custom_call.1} parent=39 // pred_check
          %p233 = pneg %p38
        $region42: #{tpu_custom_call.1} parent=39 // pred_check_branch
          %235 = sbr.rel (%p233) target = $region44
        $region43: #{tpu_custom_call.1} parent=39 // pred_region
          %p236 = scmp.lt.s32.totalorder %s18, 1
          %s237 = scalar_select %p236, %s18, 1
          %s238 = smul.addr %s237, 2
          %s239 = scalar_lea.vmem %s0, %s238
        $region44: #{tpu_custom_call.1} parent=39 // pred_fallthru
          _
      $region40: #{tpu_custom_call.1} parent=5 // pred_fallthru
        _
      %p240 = scmp.le.s32.totalorder 1, %s18
      %p241 = scmp.lt.s32.totalorder %s18, 3
      %p242 = pnand %p240, %p241
      %p243 = pneg %p242
      // Predicated region
      $region45: #{tpu_custom_call.1} parent=5 // pred_check
        _
      $region46: #{tpu_custom_call.1} parent=5 // pred_check_branch
        %245 = sbr.rel (%p242) target = $region48
      $region47: #{tpu_custom_call.1} parent=5 // pred_region
        %s246 = ssub.s32 %s18, 1
        %p247 = scmp.lt.s32.totalorder %s23, 1
        %s248 = scalar_select %p247, %s23, 1
        %s249 = smul.addr %s248, 2
        %s250 = scalar_lea.vmem %s0, %s249
        %p251 = pneg %p44
        %p252 = pneg %p41
        %p253 = pneg %p65
        %p254 = pneg %p62
        %p255 = pneg %p86
        %p256 = pneg %p83
        %p257 = pneg %p107
        %p258 = pneg %p104
        %p259 = pneg %p128
        %p260 = pneg %p125
        %p261 = pneg %p149
        %p262 = pneg %p146
        %p263 = pneg %p170
        %p264 = pneg %p167
        %p265 = pneg %p196
        %p266 = pneg %p193
        %s267 = sand.u32 %s183, 1
        %s268 = scalar_lea.sflag [#allocation4], %s267
        %s269 = sand.u32 %s183, 1
        %s270 = scalar_lea.vmem [#allocation3], %s269
        %p271 = scmp.lt.s32.totalorder %s23, 1
        %s272 = scalar_select %p271, %s23, 1
        %s273 = smul.addr %s272, 2
        %s274 = scalar_lea.vmem %s0, %s273
        %v275 = vld [vmem:[%s274] sm:$0x3]
        %v276 = vld [vmem:[%s1] sm:$0xff]
        %v277 = vld [vmem:[%s1 + $0x8] sm:$0xff]
        %v278 = vld [vmem:[%s1 + $0x10] sm:$0xff]
        %v279 = vld [vmem:[%s1 + $0x18] sm:$0xff]
        %v280 = vld [vmem:[%s2] sm:$0xff]
        %v281 = vld [vmem:[%s2 + $0x8] sm:$0xff]
        %v282 = vld [vmem:[%s2 + $0x10] sm:$0xff]
        %v283 = vld [vmem:[%s2 + $0x18] sm:$0xff]
        %285 = vset.pattern.permute.xlu0 0
        %286 = vperm.xlu0 %285, %v276
        %v287 = vpop.permute.xlu0 %286
        %290 = vset.pattern.permute.xlu0 0
        %291 = vperm.xlu0 %290, %v277
        %v292 = vpop.permute.xlu0 %291
        %295 = vset.pattern.permute.xlu0 0
        %296 = vperm.xlu0 %295, %v278
        %v297 = vpop.permute.xlu0 %296
        %300 = vset.pattern.permute.xlu0 0
        %301 = vperm.xlu0 %300, %v279
        %v302 = vpop.permute.xlu0 %301
        %v304 = vlaneseq
        %v305 = vshrl.u32 %v304, 7
        %v306 = vsub.s32 0, %v305
        %v307 = vrot.slane %v275, %v306
        %v308 = vmul.f32 %v287, %v307
        %v309 = vmul.f32 %v292, %v307
        %v310 = vmul.f32 %v297, %v307
        %v311 = vmul.f32 %v302, %v307
        %313 = vset.pattern.permute.xlu0 0
        %314 = vperm.xlu0 %313, %v280
        %v315 = vpop.permute.xlu0 %314
        %318 = vset.pattern.permute.xlu0 0
        %319 = vperm.xlu0 %318, %v281
        %v320 = vpop.permute.xlu0 %319
        %323 = vset.pattern.permute.xlu0 0
        %324 = vperm.xlu0 %323, %v282
        %v325 = vpop.permute.xlu0 %324
        %328 = vset.pattern.permute.xlu0 0
        %329 = vperm.xlu0 %328, %v283
        %v330 = vpop.permute.xlu0 %329
        %v332 = vadd.f32 %v315, %v308
        %v333 = vadd.f32 %v320, %v309
        %v334 = vadd.f32 %v325, %v310
        %v335 = vadd.f32 %v330, %v311
        %336 = vset.pattern.permute.xlu0 1
        %337 = vperm.xlu0 %336, %v276
        %v338 = vpop.permute.xlu0 %337
        %340 = vset.pattern.permute.xlu0 1
        %341 = vperm.xlu0 %340, %v277
        %v342 = vpop.permute.xlu0 %341
        %344 = vset.pattern.permute.xlu0 1
        %345 = vperm.xlu0 %344, %v278
        %v346 = vpop.permute.xlu0 %345
        %348 = vset.pattern.permute.xlu0 1
        %349 = vperm.xlu0 %348, %v279
        %v350 = vpop.permute.xlu0 %349
        %v352 = vlaneseq
        %v353 = vshrl.u32 %v352, 7
        %v354 = vsub.s32 1, %v353
        %v355 = vrot.slane %v275, %v354
        %v356 = vmul.f32 %v338, %v355
        %v357 = vmul.f32 %v342, %v355
        %v358 = vmul.f32 %v346, %v355
        %v359 = vmul.f32 %v350, %v355
        %v360 = vadd.f32 %v332, %v356
        %v361 = vadd.f32 %v333, %v357
        %v362 = vadd.f32 %v334, %v358
        %v363 = vadd.f32 %v335, %v359
        %v364 = vtanh.pop %v360
        %v365 = vtanh.pop %v361
        %v366 = vtanh.pop %v362
        %v367 = vtanh.pop %v363
        %v368 = vld [vmem:[%s3] sm:$0xff]
        %v369 = vld [vmem:[%s3 + $0x8] sm:$0xff]
        %v370 = vld [vmem:[%s3 + $0x10] sm:$0xff]
        %v371 = vld [vmem:[%s3 + $0x18] sm:$0xff]
        %v372 = vld [vmem:[%s4] sm:$0xff]
        %v373 = vld [vmem:[%s4 + $0x8] sm:$0xff]
        %v374 = vld [vmem:[%s4 + $0x10] sm:$0xff]
        %v375 = vld [vmem:[%s4 + $0x18] sm:$0xff]
        %377 = vset.pattern.permute.xlu0 0
        %378 = vperm.xlu0 %377, %v372
        %v379 = vpop.permute.xlu0 %378
        %382 = vset.pattern.permute.xlu0 0
        %383 = vperm.xlu0 %382, %v373
        %v384 = vpop.permute.xlu0 %383
        %387 = vset.pattern.permute.xlu0 0
        %388 = vperm.xlu0 %387, %v374
        %v389 = vpop.permute.xlu0 %388
        %392 = vset.pattern.permute.xlu0 0
        %393 = vperm.xlu0 %392, %v375
        %v394 = vpop.permute.xlu0 %393
        %vm396 = vcmask 261120
        %v398 = vsel %vm396, %v368, 0
        %v401 = vsel %vm396, %v369, 0
        %v404 = vsel %vm396, %v370, 0
        %v407 = vsel %vm396, %v371, 0
        %409 = vmatprep.subr.mxu0 0.0
        %v410 = vand.u32 %v364, 4294901760
        %411 = vmatpush1.msra.mxu0 %v410
        %412 = vmatprep.subr.mxu0 0.0
        %v413 = vand.u32 %v365, 4294901760
        %414 = vmatpush1.msra.mxu0 %v413
        %415 = vmatprep.subr.mxu0 0.0
        %v416 = vand.u32 %v366, 4294901760
        %417 = vmatpush1.msra.mxu0 %v416
        %418 = vmatprep.subr.mxu0 0.0
        %v419 = vand.u32 %v367, 4294901760
        %420 = vmatpush1.msra.mxu0 %v419
        %421 = vmatprep.subr.mxu0 0.0
        %422 = vmatpush1.msra.mxu0 0.0
        %423 = vmatprep.subr.mxu0 0.0
        %424 = vmatpush1.msra.mxu0 0.0
        %425 = vmatprep.subr.mxu0 0.0
        %426 = vmatpush1.msra.mxu0 0.0
        %427 = vmatprep.subr.mxu0 0.0
        %428 = vmatpush1.msra.mxu0 0.0
        %429 = vmatprep.subr.mxu0 0.0
        %430 = vmatpush1.msra.mxu0 0.0
        %431 = vmatprep.subr.mxu0 0.0
        %432 = vmatpush1.msra.mxu0 0.0
        %433 = vmatprep.subr.mxu0 0.0
        %434 = vmatpush1.msra.mxu0 0.0
        %435 = vmatprep.subr.mxu0 0.0
        %436 = vmatpush1.msra.mxu0 0.0
        %437 = vmatprep.subr.mxu0 0.0
        %438 = vmatpush1.msra.mxu0 0.0
        %439 = vmatprep.subr.mxu0 0.0
        %440 = vmatpush1.msra.mxu0 0.0
        %441 = vmatprep.subr.mxu0 0.0
        %442 = vmatpush1.msra.mxu0 0.0
        %443 = vmatprep.subr.mxu0 0.0
        %444 = vmatpush1.msra.mxu0 0.0
        %445 = vmatprep.subr.mxu0 0.0
        %446 = vmatpush1.msra.mxu0 0.0
        %447 = vmatprep.subr.mxu0 0.0
        %448 = vmatpush1.msra.mxu0 0.0
        %449 = vmatprep.subr.mxu0 0.0
        %450 = vmatpush1.msra.mxu0 0.0
        %451 = vmatprep.subr.mxu0 0.0
        %452 = vmatpush1.msra.mxu0 0.0
        %453 = vmatprep.subr.mxu0 0.0
        %454 = vmatpush1.msra.mxu0 0.0
        %455 = vmatprep.subr.mxu0 0.0
        %456 = vmatpush1.msra.mxu0 0.0
        %457 = vmatprep.subr.mxu0 0.0
        %458 = vmatpush1.msra.mxu0 0.0
        %459 = vmatprep.subr.mxu0 0.0
        %460 = vmatpush1.msra.mxu0 0.0
        %461 = vmatprep.subr.mxu0 0.0
        %462 = vmatpush1.msra.mxu0 0.0
        %463 = vmatprep.subr.mxu0 0.0
        %464 = vmatpush1.msra.mxu0 0.0
        %465 = vmatprep.subr.mxu0 0.0
        %466 = vmatpush1.msra.mxu0 0.0
        %467 = vmatprep.subr.mxu0 0.0
        %468 = vmatpush1.msra.mxu0 0.0
        %469 = vmatprep.subr.mxu0 0.0
        %470 = vmatpush1.msra.mxu0 0.0
        %471 = vmatprep.subr.mxu0 0.0
        %472 = vmatpush1.msra.mxu0 0.0
        %473 = vmatprep.subr.mxu0 0.0
        %474 = vmatpush1.msra.mxu0 0.0
        %475 = vmatprep.subr.mxu0 0.0
        %476 = vmatpush1.msra.mxu0 0.0
        %477 = vmatprep.mubr.f32.mxu0 0.0
        %v478 = vand.u32 %v398, 4294901760
        %v479 = vsub.f32 %v398, %v478
        %v480 = vand.u32 %v479, 4294901760
        %v481 = vsub.f32 %v479, %v480
        %v482 = vand.u32 %v481, 4294901760
        %483 = vmatmul.mubr.f32.gmra.mrb[0].mxu0 %v482
        %v484 = vpop.f32.mrb[0].mxu0
        %v485 = vadd.f32 %v379, %v484
        %v486 = vpop.f32.mrb[0].mxu0
        %487 = vmatprep.mubr.f32.mxu0 0.0
        %v488 = vand.u32 %v401, 4294901760
        %v489 = vsub.f32 %v401, %v488
        %v490 = vand.u32 %v489, 4294901760
        %v491 = vsub.f32 %v489, %v490
        %v492 = vand.u32 %v491, 4294901760
        %493 = vmatmul.mubr.f32.gmra.mrb[0].mxu0 %v492
        %v494 = vpop.f32.mrb[0].mxu0
        %v495 = vadd.f32 %v384, %v494
        %v496 = vpop.f32.mrb[0].mxu0
        %497 = vmatprep.mubr.f32.mxu0 0.0
        %v498 = vand.u32 %v404, 4294901760
        %v499 = vsub.f32 %v404, %v498
        %v500 = vand.u32 %v499, 4294901760
        %v501 = vsub.f32 %v499, %v500
        %v502 = vand.u32 %v501, 4294901760
        %503 = vmatmul.mubr.f32.gmra.mrb[0].mxu0 %v502
        %v504 = vpop.f32.mrb[0].mxu0
        %v505 = vadd.f32 %v389, %v504
        %v506 = vpop.f32.mrb[0].mxu0
        %507 = vmatprep.mubr.f32.mxu0 0.0
        %v508 = vand.u32 %v407, 4294901760
        %v509 = vsub.f32 %v407, %v508
        %v510 = vand.u32 %v509, 4294901760
        %v511 = vsub.f32 %v509, %v510
        %v512 = vand.u32 %v511, 4294901760
        %513 = vmatmul.mubr.f32.gmra.mrb[0].mxu0 %v512
        %v514 = vpop.f32.mrb[0].mxu0
        %v515 = vadd.f32 %v394, %v514
        %v516 = vpop.f32.mrb[0].mxu0
        %517 = vdwg.mxu0
        %518 = vmatprep.subr.mxu0 0.0
        %v519 = vand.u32 %v364, 4294901760
        %v520 = vsub.f32 %v364, %v519
        %v521 = vand.u32 %v520, 4294901760
        %v522 = vsub.f32 %v520, %v521
        %v523 = vand.u32 %v522, 4294901760
        %524 = vmatpush1.msra.mxu0 %v523
        %525 = vmatprep.subr.mxu0 0.0
        %v526 = vand.u32 %v365, 4294901760
        %v527 = vsub.f32 %v365, %v526
        %v528 = vand.u32 %v527, 4294901760
        %v529 = vsub.f32 %v527, %v528
        %v530 = vand.u32 %v529, 4294901760
        %531 = vmatpush1.msra.mxu0 %v530
        %532 = vmatprep.subr.mxu0 0.0
        %v533 = vand.u32 %v366, 4294901760
        %v534 = vsub.f32 %v366, %v533
        %v535 = vand.u32 %v534, 4294901760
        %v536 = vsub.f32 %v534, %v535
        %v537 = vand.u32 %v536, 4294901760
        %538 = vmatpush1.msra.mxu0 %v537
        %539 = vmatprep.subr.mxu0 0.0
        %v540 = vand.u32 %v367, 4294901760
        %v541 = vsub.f32 %v367, %v540
        %v542 = vand.u32 %v541, 4294901760
        %v543 = vsub.f32 %v541, %v542
        %v544 = vand.u32 %v543, 4294901760
        %545 = vmatpush1.msra.mxu0 %v544
        %546 = vmatprep.subr.mxu0 0.0
        %547 = vmatpush1.msra.mxu0 0.0
        %548 = vmatprep.subr.mxu0 0.0
        %549 = vmatpush1.msra.mxu0 0.0
        %550 = vmatprep.subr.mxu0 0.0
        %551 = vmatpush1.msra.mxu0 0.0
        %552 = vmatprep.subr.mxu0 0.0
        %553 = vmatpush1.msra.mxu0 0.0
        %554 = vmatprep.subr.mxu0 0.0
        %555 = vmatpush1.msra.mxu0 0.0
        %556 = vmatprep.subr.mxu0 0.0
        %557 = vmatpush1.msra.mxu0 0.0
        %558 = vmatprep.subr.mxu0 0.0
        %559 = vmatpush1.msra.mxu0 0.0
        %560 = vmatprep.subr.mxu0 0.0
        %561 = vmatpush1.msra.mxu0 0.0
        %562 = vmatprep.subr.mxu0 0.0
        %563 = vmatpush1.msra.mxu0 0.0
        %564 = vmatprep.subr.mxu0 0.0
        %565 = vmatpush1.msra.mxu0 0.0
        %566 = vmatprep.subr.mxu0 0.0
        %567 = vmatpush1.msra.mxu0 0.0
        %568 = vmatprep.subr.mxu0 0.0
        %569 = vmatpush1.msra.mxu0 0.0
        %570 = vmatprep.subr.mxu0 0.0
        %571 = vmatpush1.msra.mxu0 0.0
        %572 = vmatprep.subr.mxu0 0.0
        %573 = vmatpush1.msra.mxu0 0.0
        %574 = vmatprep.subr.mxu0 0.0
        %575 = vmatpush1.msra.mxu0 0.0
        %576 = vmatprep.subr.mxu0 0.0
        %577 = vmatpush1.msra.mxu0 0.0
        %578 = vmatprep.subr.mxu0 0.0
        %579 = vmatpush1.msra.mxu0 0.0
        %580 = vmatprep.subr.mxu0 0.0
        %581 = vmatpush1.msra.mxu0 0.0
        %582 = vmatprep.subr.mxu0 0.0
        %583 = vmatpush1.msra.mxu0 0.0
        %584 = vmatprep.subr.mxu0 0.0
        %585 = vmatpush1.msra.mxu0 0.0
        %586 = vmatprep.subr.mxu0 0.0
        %587 = vmatpush1.msra.mxu0 0.0
        %588 = vmatprep.subr.mxu0 0.0
        %589 = vmatpush1.msra.mxu0 0.0
        %590 = vmatprep.subr.mxu0 0.0
        %591 = vmatpush1.msra.mxu0 0.0
        %592 = vmatprep.subr.mxu0 0.0
        %593 = vmatpush1.msra.mxu0 0.0
        %594 = vmatprep.subr.mxu0 0.0
        %595 = vmatpush1.msra.mxu0 0.0
        %596 = vmatprep.subr.mxu0 0.0
        %597 = vmatpush1.msra.mxu0 0.0
        %598 = vmatprep.subr.mxu0 0.0
        %599 = vmatpush1.msra.mxu0 0.0
        %600 = vmatprep.subr.mxu0 0.0
        %601 = vmatpush1.msra.mxu0 0.0
        %602 = vmatprep.mubr.f32.mxu0 0.0
        %v603 = vand.u32 %v398, 4294901760
        %604 = vmatmul.mubr.f32.gmra.mrb[0].mxu0 %v603
        %v605 = vpop.f32.mrb[0].mxu0
        %v606 = vadd.f32 %v485, %v605
        %v607 = vpop.f32.mrb[0].mxu0
        %608 = vmatprep.mubr.f32.mxu0 0.0
        %v609 = vand.u32 %v401, 4294901760
        %610 = vmatmul.mubr.f32.gmra.mrb[0].mxu0 %v609
        %v611 = vpop.f32.mrb[0].mxu0
        %v612 = vadd.f32 %v495, %v611
        %v613 = vpop.f32.mrb[0].mxu0
        %614 = vmatprep.mubr.f32.mxu0 0.0
        %v615 = vand.u32 %v404, 4294901760
        %616 = vmatmul.mubr.f32.gmra.mrb[0].mxu0 %v615
        %v617 = vpop.f32.mrb[0].mxu0
        %v618 = vadd.f32 %v505, %v617
        %v619 = vpop.f32.mrb[0].mxu0
        %620 = vmatprep.mubr.f32.mxu0 0.0
        %v621 = vand.u32 %v407, 4294901760
        %622 = vmatmul.mubr.f32.gmra.mrb[0].mxu0 %v621
        %v623 = vpop.f32.mrb[0].mxu0
        %v624 = vadd.f32 %v515, %v623
        %v625 = vpop.f32.mrb[0].mxu0
        %626 = vdwg.mxu0
        %627 = vmatprep.subr.mxu0 0.0
        %v628 = vand.u32 %v364, 4294901760
        %v629 = vsub.f32 %v364, %v628
        %630 = vmatpush1.msra.mxu0 %v629
        %631 = vmatprep.subr.mxu0 0.0
        %v632 = vand.u32 %v365, 4294901760
        %v633 = vsub.f32 %v365, %v632
        %634 = vmatpush1.msra.mxu0 %v633
        %635 = vmatprep.subr.mxu0 0.0
        %v636 = vand.u32 %v366, 4294901760
        %v637 = vsub.f32 %v366, %v636
        %638 = vmatpush1.msra.mxu0 %v637
        %639 = vmatprep.subr.mxu0 0.0
        %v640 = vand.u32 %v367, 4294901760
        %v641 = vsub.f32 %v367, %v640
        %642 = vmatpush1.msra.mxu0 %v641
        %643 = vmatprep.subr.mxu0 0.0
        %644 = vmatpush1.msra.mxu0 0.0
        %645 = vmatprep.subr.mxu0 0.0
        %646 = vmatpush1.msra.mxu0 0.0
        %647 = vmatprep.subr.mxu0 0.0
        %648 = vmatpush1.msra.mxu0 0.0
        %649 = vmatprep.subr.mxu0 0.0
        %650 = vmatpush1.msra.mxu0 0.0
        %651 = vmatprep.subr.mxu0 0.0
        %652 = vmatpush1.msra.mxu0 0.0
        %653 = vmatprep.subr.mxu0 0.0
        %654 = vmatpush1.msra.mxu0 0.0
        %655 = vmatprep.subr.mxu0 0.0
        %656 = vmatpush1.msra.mxu0 0.0
        %657 = vmatprep.subr.mxu0 0.0
        %658 = vmatpush1.msra.mxu0 0.0
        %659 = vmatprep.subr.mxu0 0.0
        %660 = vmatpush1.msra.mxu0 0.0
        %661 = vmatprep.subr.mxu0 0.0
        %662 = vmatpush1.msra.mxu0 0.0
        %663 = vmatprep.subr.mxu0 0.0
        %664 = vmatpush1.msra.mxu0 0.0
        %665 = vmatprep.subr.mxu0 0.0
        %666 = vmatpush1.msra.mxu0 0.0
        %667 = vmatprep.subr.mxu0 0.0
        %668 = vmatpush1.msra.mxu0 0.0
        %669 = vmatprep.subr.mxu0 0.0
        %670 = vmatpush1.msra.mxu0 0.0
        %671 = vmatprep.subr.mxu0 0.0
        %672 = vmatpush1.msra.mxu0 0.0
        %673 = vmatprep.subr.mxu0 0.0
        %674 = vmatpush1.msra.mxu0 0.0
        %675 = vmatprep.subr.mxu0 0.0
        %676 = vmatpush1.msra.mxu0 0.0
        %677 = vmatprep.subr.mxu0 0.0
        %678 = vmatpush1.msra.mxu0 0.0
        %679 = vmatprep.subr.mxu0 0.0
        %680 = vmatpush1.msra.mxu0 0.0
        %681 = vmatprep.subr.mxu0 0.0
        %682 = vmatpush1.msra.mxu0 0.0
        %683 = vmatprep.subr.mxu0 0.0
        %684 = vmatpush1.msra.mxu0 0.0
        %685 = vmatprep.subr.mxu0 0.0
        %686 = vmatpush1.msra.mxu0 0.0
        %687 = vmatprep.subr.mxu0 0.0
        %688 = vmatpush1.msra.mxu0 0.0
        %689 = vmatprep.subr.mxu0 0.0
        %690 = vmatpush1.msra.mxu0 0.0
        %691 = vmatprep.subr.mxu0 0.0
        %692 = vmatpush1.msra.mxu0 0.0
        %693 = vmatprep.subr.mxu0 0.0
        %694 = vmatpush1.msra.mxu0 0.0
        %695 = vmatprep.subr.mxu0 0.0
        %696 = vmatpush1.msra.mxu0 0.0
        %697 = vmatprep.subr.mxu0 0.0
        %698 = vmatpush1.msra.mxu0 0.0
        %699 = vmatprep.mubr.f32.mxu0 0.0
        %v700 = vand.u32 %v398, 4294901760
        %v701 = vsub.f32 %v398, %v700
        %702 = vmatmul.mubr.f32.gmra.mrb[0].mxu0 %v701
        %v703 = vpop.f32.mrb[0].mxu0
        %v704 = vadd.f32 %v606, %v703
        %v705 = vpop.f32.mrb[0].mxu0
        %706 = vmatprep.mubr.f32.mxu0 0.0
        %v707 = vand.u32 %v401, 4294901760
        %v708 = vsub.f32 %v401, %v707
        %709 = vmatmul.mubr.f32.gmra.mrb[0].mxu0 %v708
        %v710 = vpop.f32.mrb[0].mxu0
        %v711 = vadd.f32 %v612, %v710
        %v712 = vpop.f32.mrb[0].mxu0
        %713 = vmatprep.mubr.f32.mxu0 0.0
        %v714 = vand.u32 %v404, 4294901760
        %v715 = vsub.f32 %v404, %v714
        %716 = vmatmul.mubr.f32.gmra.mrb[0].mxu0 %v715
        %v717 = vpop.f32.mrb[0].mxu0
        %v718 = vadd.f32 %v618, %v717
        %v719 = vpop.f32.mrb[0].mxu0
        %720 = vmatprep.mubr.f32.mxu0 0.0
        %v721 = vand.u32 %v407, 4294901760
        %v722 = vsub.f32 %v407, %v721
        %723 = vmatmul.mubr.f32.gmra.mrb[0].mxu0 %v722
        %v724 = vpop.f32.mrb[0].mxu0
        %v725 = vadd.f32 %v624, %v724
        %v726 = vpop.f32.mrb[0].mxu0
        %727 = vdwg.mxu0
        %728 = vmatprep.subr.mxu0 0.0
        %v729 = vand.u32 %v364, 4294901760
        %730 = vmatpush1.msra.mxu0 %v729
        %731 = vmatprep.subr.mxu0 0.0
        %v732 = vand.u32 %v365, 4294901760
        %733 = vmatpush1.msra.mxu0 %v732
        %734 = vmatprep.subr.mxu0 0.0
        %v735 = vand.u32 %v366, 4294901760
        %736 = vmatpush1.msra.mxu0 %v735
        %737 = vmatprep.subr.mxu0 0.0
        %v738 = vand.u32 %v367, 4294901760
        %739 = vmatpush1.msra.mxu0 %v738
        %740 = vmatprep.subr.mxu0 0.0
        %741 = vmatpush1.msra.mxu0 0.0
        %742 = vmatprep.subr.mxu0 0.0
        %743 = vmatpush1.msra.mxu0 0.0
        %744 = vmatprep.subr.mxu0 0.0
        %745 = vmatpush1.msra.mxu0 0.0
        %746 = vmatprep.subr.mxu0 0.0
        %747 = vmatpush1.msra.mxu0 0.0
        %748 = vmatprep.subr.mxu0 0.0
        %749 = vmatpush1.msra.mxu0 0.0
        %750 = vmatprep.subr.mxu0 0.0
        %751 = vmatpush1.msra.mxu0 0.0
        %752 = vmatprep.subr.mxu0 0.0
        %753 = vmatpush1.msra.mxu0 0.0
        %754 = vmatprep.subr.mxu0 0.0
        %755 = vmatpush1.msra.mxu0 0.0
        %756 = vmatprep.subr.mxu0 0.0
        %757 = vmatpush1.msra.mxu0 0.0
        %758 = vmatprep.subr.mxu0 0.0
        %759 = vmatpush1.msra.mxu0 0.0
        %760 = vmatprep.subr.mxu0 0.0
        %761 = vmatpush1.msra.mxu0 0.0
        %762 = vmatprep.subr.mxu0 0.0
        %763 = vmatpush1.msra.mxu0 0.0
        %764 = vmatprep.subr.mxu0 0.0
        %765 = vmatpush1.msra.mxu0 0.0
        %766 = vmatprep.subr.mxu0 0.0
        %767 = vmatpush1.msra.mxu0 0.0
        %768 = vmatprep.subr.mxu0 0.0
        %769 = vmatpush1.msra.mxu0 0.0
        %770 = vmatprep.subr.mxu0 0.0
        %771 = vmatpush1.msra.mxu0 0.0
        %772 = vmatprep.subr.mxu0 0.0
        %773 = vmatpush1.msra.mxu0 0.0
        %774 = vmatprep.subr.mxu0 0.0
        %775 = vmatpush1.msra.mxu0 0.0
        %776 = vmatprep.subr.mxu0 0.0
        %777 = vmatpush1.msra.mxu0 0.0
        %778 = vmatprep.subr.mxu0 0.0
        %779 = vmatpush1.msra.mxu0 0.0
        %780 = vmatprep.subr.mxu0 0.0
        %781 = vmatpush1.msra.mxu0 0.0
        %782 = vmatprep.subr.mxu0 0.0
        %783 = vmatpush1.msra.mxu0 0.0
        %784 = vmatprep.subr.mxu0 0.0
        %785 = vmatpush1.msra.mxu0 0.0
        %786 = vmatprep.subr.mxu0 0.0
        %787 = vmatpush1.msra.mxu0 0.0
        %788 = vmatprep.subr.mxu0 0.0
        %789 = vmatpush1.msra.mxu0 0.0
        %790 = vmatprep.subr.mxu0 0.0
        %791 = vmatpush1.msra.mxu0 0.0
        %792 = vmatprep.subr.mxu0 0.0
        %793 = vmatpush1.msra.mxu0 0.0
        %794 = vmatprep.subr.mxu0 0.0
        %795 = vmatpush1.msra.mxu0 0.0
        %796 = vmatprep.mubr.f32.mxu0 0.0
        %v797 = vand.u32 %v398, 4294901760
        %v798 = vsub.f32 %v398, %v797
        %v799 = vand.u32 %v798, 4294901760
        %800 = vmatmul.mubr.f32.gmra.mrb[0].mxu0 %v799
        %v801 = vpop.f32.mrb[0].mxu0
        %v802 = vadd.f32 %v704, %v801
        %v803 = vpop.f32.mrb[0].mxu0
        %804 = vmatprep.mubr.f32.mxu0 0.0
        %v805 = vand.u32 %v401, 4294901760
        %v806 = vsub.f32 %v401, %v805
        %v807 = vand.u32 %v806, 4294901760
        %808 = vmatmul.mubr.f32.gmra.mrb[0].mxu0 %v807
        %v809 = vpop.f32.mrb[0].mxu0
        %v810 = vadd.f32 %v711, %v809
        %v811 = vpop.f32.mrb[0].mxu0
        %812 = vmatprep.mubr.f32.mxu0 0.0
        %v813 = vand.u32 %v404, 4294901760
        %v814 = vsub.f32 %v404, %v813
        %v815 = vand.u32 %v814, 4294901760
        %816 = vmatmul.mubr.f32.gmra.mrb[0].mxu0 %v815
        %v817 = vpop.f32.mrb[0].mxu0
        %v818 = vadd.f32 %v718, %v817
        %v819 = vpop.f32.mrb[0].mxu0
        %820 = vmatprep.mubr.f32.mxu0 0.0
        %v821 = vand.u32 %v407, 4294901760
        %v822 = vsub.f32 %v407, %v821
        %v823 = vand.u32 %v822, 4294901760
        %824 = vmatmul.mubr.f32.gmra.mrb[0].mxu0 %v823
        %v825 = vpop.f32.mrb[0].mxu0
        %v826 = vadd.f32 %v725, %v825
        %v827 = vpop.f32.mrb[0].mxu0
        %828 = vdwg.mxu0
        %829 = vmatprep.subr.mxu0 0.0
        %v830 = vand.u32 %v364, 4294901760
        %v831 = vsub.f32 %v364, %v830
        %v832 = vand.u32 %v831, 4294901760
        %833 = vmatpush1.msra.mxu0 %v832
        %834 = vmatprep.subr.mxu0 0.0
        %v835 = vand.u32 %v365, 4294901760
        %v836 = vsub.f32 %v365, %v835
        %v837 = vand.u32 %v836, 4294901760
        %838 = vmatpush1.msra.mxu0 %v837
        %839 = vmatprep.subr.mxu0 0.0
        %v840 = vand.u32 %v366, 4294901760
        %v841 = vsub.f32 %v366, %v840
        %v842 = vand.u32 %v841, 4294901760
        %843 = vmatpush1.msra.mxu0 %v842
        %844 = vmatprep.subr.mxu0 0.0
        %v845 = vand.u32 %v367, 4294901760
        %v846 = vsub.f32 %v367, %v845
        %v847 = vand.u32 %v846, 4294901760
        %848 = vmatpush1.msra.mxu0 %v847
        %849 = vmatprep.subr.mxu0 0.0
        %850 = vmatpush1.msra.mxu0 0.0
        %851 = vmatprep.subr.mxu0 0.0
        %852 = vmatpush1.msra.mxu0 0.0
        %853 = vmatprep.subr.mxu0 0.0
        %854 = vmatpush1.msra.mxu0 0.0
        %855 = vmatprep.subr.mxu0 0.0
        %856 = vmatpush1.msra.mxu0 0.0
        %857 = vmatprep.subr.mxu0 0.0
        %858 = vmatpush1.msra.mxu0 0.0
        %859 = vmatprep.subr.mxu0 0.0
        %860 = vmatpush1.msra.mxu0 0.0
        %861 = vmatprep.subr.mxu0 0.0
        %862 = vmatpush1.msra.mxu0 0.0
        %863 = vmatprep.subr.mxu0 0.0
        %864 = vmatpush1.msra.mxu0 0.0
        %865 = vmatprep.subr.mxu0 0.0
        %866 = vmatpush1.msra.mxu0 0.0
        %867 = vmatprep.subr.mxu0 0.0
        %868 = vmatpush1.msra.mxu0 0.0
        %869 = vmatprep.subr.mxu0 0.0
        %870 = vmatpush1.msra.mxu0 0.0
        %871 = vmatprep.subr.mxu0 0.0
        %872 = vmatpush1.msra.mxu0 0.0
        %873 = vmatprep.subr.mxu0 0.0
        %874 = vmatpush1.msra.mxu0 0.0
        %875 = vmatprep.subr.mxu0 0.0
        %876 = vmatpush1.msra.mxu0 0.0
        %877 = vmatprep.subr.mxu0 0.0
        %878 = vmatpush1.msra.mxu0 0.0
        %879 = vmatprep.subr.mxu0 0.0
        %880 = vmatpush1.msra.mxu0 0.0
        %881 = vmatprep.subr.mxu0 0.0
        %882 = vmatpush1.msra.mxu0 0.0
        %883 = vmatprep.subr.mxu0 0.0
        %884 = vmatpush1.msra.mxu0 0.0
        %885 = vmatprep.subr.mxu0 0.0
        %886 = vmatpush1.msra.mxu0 0.0
        %887 = vmatprep.subr.mxu0 0.0
        %888 = vmatpush1.msra.mxu0 0.0
        %889 = vmatprep.subr.mxu0 0.0
        %890 = vmatpush1.msra.mxu0 0.0
        %891 = vmatprep.subr.mxu0 0.0
        %892 = vmatpush1.msra.mxu0 0.0
        %893 = vmatprep.subr.mxu0 0.0
        %894 = vmatpush1.msra.mxu0 0.0
        %895 = vmatprep.subr.mxu0 0.0
        %896 = vmatpush1.msra.mxu0 0.0
        %897 = vmatprep.subr.mxu0 0.0
        %898 = vmatpush1.msra.mxu0 0.0
        %899 = vmatprep.subr.mxu0 0.0
        %900 = vmatpush1.msra.mxu0 0.0
        %901 = vmatprep.subr.mxu0 0.0
        %902 = vmatpush1.msra.mxu0 0.0
        %903 = vmatprep.subr.mxu0 0.0
        %904 = vmatpush1.msra.mxu0 0.0
        %905 = vmatprep.mubr.f32.mxu0 0.0
        %v906 = vand.u32 %v398, 4294901760
        %907 = vmatmul.mubr.f32.gmra.mrb[0].mxu0 %v906
        %v908 = vpop.f32.mrb[0].mxu0
        %v909 = vadd.f32 %v802, %v908
        %v910 = vpop.f32.mrb[0].mxu0
        %911 = vmatprep.mubr.f32.mxu0 0.0
        %v912 = vand.u32 %v401, 4294901760
        %913 = vmatmul.mubr.f32.gmra.mrb[0].mxu0 %v912
        %v914 = vpop.f32.mrb[0].mxu0
        %v915 = vadd.f32 %v810, %v914
        %v916 = vpop.f32.mrb[0].mxu0
        %917 = vmatprep.mubr.f32.mxu0 0.0
        %v918 = vand.u32 %v404, 4294901760
        %919 = vmatmul.mubr.f32.gmra.mrb[0].mxu0 %v918
        %v920 = vpop.f32.mrb[0].mxu0
        %v921 = vadd.f32 %v818, %v920
        %v922 = vpop.f32.mrb[0].mxu0
        %923 = vmatprep.mubr.f32.mxu0 0.0
        %v924 = vand.u32 %v407, 4294901760
        %925 = vmatmul.mubr.f32.gmra.mrb[0].mxu0 %v924
        %v926 = vpop.f32.mrb[0].mxu0
        %v927 = vadd.f32 %v826, %v926
        %v928 = vpop.f32.mrb[0].mxu0
        %929 = vdwg.mxu0
        %930 = vmatprep.subr.mxu0 0.0
        %v931 = vand.u32 %v364, 4294901760
        %932 = vmatpush1.msra.mxu0 %v931
        %933 = vmatprep.subr.mxu0 0.0
        %v934 = vand.u32 %v365, 4294901760
        %935 = vmatpush1.msra.mxu0 %v934
        %936 = vmatprep.subr.mxu0 0.0
        %v937 = vand.u32 %v366, 4294901760
        %938 = vmatpush1.msra.mxu0 %v937
        %939 = vmatprep.subr.mxu0 0.0
        %v940 = vand.u32 %v367, 4294901760
        %941 = vmatpush1.msra.mxu0 %v940
        %942 = vmatprep.subr.mxu0 0.0
        %943 = vmatpush1.msra.mxu0 0.0
        %944 = vmatprep.subr.mxu0 0.0
        %945 = vmatpush1.msra.mxu0 0.0
        %946 = vmatprep.subr.mxu0 0.0
        %947 = vmatpush1.msra.mxu0 0.0
        %948 = vmatprep.subr.mxu0 0.0
        %949 = vmatpush1.msra.mxu0 0.0
        %950 = vmatprep.subr.mxu0 0.0
        %951 = vmatpush1.msra.mxu0 0.0
        %952 = vmatprep.subr.mxu0 0.0
        %953 = vmatpush1.msra.mxu0 0.0
        %954 = vmatprep.subr.mxu0 0.0
        %955 = vmatpush1.msra.mxu0 0.0
        %956 = vmatprep.subr.mxu0 0.0
        %957 = vmatpush1.msra.mxu0 0.0
        %958 = vmatprep.subr.mxu0 0.0
        %959 = vmatpush1.msra.mxu0 0.0
        %960 = vmatprep.subr.mxu0 0.0
        %961 = vmatpush1.msra.mxu0 0.0
        %962 = vmatprep.subr.mxu0 0.0
        %963 = vmatpush1.msra.mxu0 0.0
        %964 = vmatprep.subr.mxu0 0.0
        %965 = vmatpush1.msra.mxu0 0.0
        %966 = vmatprep.subr.mxu0 0.0
        %967 = vmatpush1.msra.mxu0 0.0
        %968 = vmatprep.subr.mxu0 0.0
        %969 = vmatpush1.msra.mxu0 0.0
        %970 = vmatprep.subr.mxu0 0.0
        %971 = vmatpush1.msra.mxu0 0.0
        %972 = vmatprep.subr.mxu0 0.0
        %973 = vmatpush1.msra.mxu0 0.0
        %974 = vmatprep.subr.mxu0 0.0
        %975 = vmatpush1.msra.mxu0 0.0
        %976 = vmatprep.subr.mxu0 0.0
        %977 = vmatpush1.msra.mxu0 0.0
        %978 = vmatprep.subr.mxu0 0.0
        %979 = vmatpush1.msra.mxu0 0.0
        %980 = vmatprep.subr.mxu0 0.0
        %981 = vmatpush1.msra.mxu0 0.0
        %982 = vmatprep.subr.mxu0 0.0
        %983 = vmatpush1.msra.mxu0 0.0
        %984 = vmatprep.subr.mxu0 0.0
        %985 = vmatpush1.msra.mxu0 0.0
        %986 = vmatprep.subr.mxu0 0.0
        %987 = vmatpush1.msra.mxu0 0.0
        %988 = vmatprep.subr.mxu0 0.0
        %989 = vmatpush1.msra.mxu0 0.0
        %990 = vmatprep.subr.mxu0 0.0
        %991 = vmatpush1.msra.mxu0 0.0
        %992 = vmatprep.subr.mxu0 0.0
        %993 = vmatpush1.msra.mxu0 0.0
        %994 = vmatprep.subr.mxu0 0.0
        %995 = vmatpush1.msra.mxu0 0.0
        %996 = vmatprep.subr.mxu0 0.0
        %997 = vmatpush1.msra.mxu0 0.0
        %998 = vmatprep.mubr.f32.mxu0 0.0
        %v999 = vand.u32 %v398, 4294901760
        %1000 = vmatmul.mubr.f32.gmra.mrb[0].mxu0 %v999
        %v1001 = vpop.f32.mrb[0].mxu0
        %v1002 = vadd.f32 %v909, %v1001
        %v1003 = vpop.f32.mrb[0].mxu0
        %1004 = vmatprep.mubr.f32.mxu0 0.0
        %v1005 = vand.u32 %v401, 4294901760
        %1006 = vmatmul.mubr.f32.gmra.mrb[0].mxu0 %v1005
        %v1007 = vpop.f32.mrb[0].mxu0
        %v1008 = vadd.f32 %v915, %v1007
        %v1009 = vpop.f32.mrb[0].mxu0
        %1010 = vmatprep.mubr.f32.mxu0 0.0
        %v1011 = vand.u32 %v404, 4294901760
        %1012 = vmatmul.mubr.f32.gmra.mrb[0].mxu0 %v1011
        %v1013 = vpop.f32.mrb[0].mxu0
        %v1014 = vadd.f32 %v921, %v1013
        %v1015 = vpop.f32.mrb[0].mxu0
        %1016 = vmatprep.mubr.f32.mxu0 0.0
        %v1017 = vand.u32 %v407, 4294901760
        %1018 = vmatmul.mubr.f32.gmra.mrb[0].mxu0 %v1017
        %v1019 = vpop.f32.mrb[0].mxu0
        %v1020 = vadd.f32 %v927, %v1019
        %v1021 = vpop.f32.mrb[0].mxu0
        %1022 = vdwg.mxu0
        %v1023 = vtanh.pop %v1002
        %v1024 = vtanh.pop %v1008
        %v1025 = vtanh.pop %v1014
        %v1026 = vtanh.pop %v1020
        %v1027 = vld [vmem:[%s5] sm:$0x1]
        %v1028 = vld [vmem:[#allocation2] sm:$0x1]
        %1029 = vxpose.xlu0.b32.start [1/16] %v1027, 128
        %1030 = vxpose.xlu0.b32.cont [2/16] 0.0, 128
        %1031 = vxpose.xlu0.b32.cont [3/16] 0.0, 128
        %1032 = vxpose.xlu0.b32.cont [4/16] 0.0, 128
        %1033 = vxpose.xlu0.b32.cont [5/16] 0.0, 128
        %1034 = vxpose.xlu0.b32.cont [6/16] 0.0, 128
        %1035 = vxpose.xlu0.b32.cont [7/16] 0.0, 128
        %1036 = vxpose.xlu0.b32.cont [8/16] 0.0, 128
        %1037 = vxpose.xlu0.b32.cont [9/16] 0.0, 128
        %1038 = vxpose.xlu0.b32.cont [10/16] 0.0, 128
        %1039 = vxpose.xlu0.b32.cont [11/16] 0.0, 128
        %1040 = vxpose.xlu0.b32.cont [12/16] 0.0, 128
        %1041 = vxpose.xlu0.b32.cont [13/16] 0.0, 128
        %1042 = vxpose.xlu0.b32.cont [14/16] 0.0, 128
        %1043 = vxpose.xlu0.b32.cont [15/16] 0.0, 128
        %1044 = vxpose.xlu0.b32.end [16/16] 0.0, 128
        %v1045 = vpop.trf.xlu0
        %v1046 = vpop.trf.xlu0
        %v1047 = vpop.trf.xlu0
        %v1048 = vpop.trf.xlu0
        %v1049 = vpop.trf.xlu0
        %v1050 = vpop.trf.xlu0
        %v1051 = vpop.trf.xlu0
        %v1052 = vpop.trf.xlu0
        %v1053 = vpop.trf.xlu0
        %v1054 = vpop.trf.xlu0
        %v1055 = vpop.trf.xlu0
        %v1056 = vpop.trf.xlu0
        %v1057 = vpop.trf.xlu0
        %v1058 = vpop.trf.xlu0
        %v1059 = vpop.trf.xlu0
        %v1060 = vpop.trf.xlu0
        %1062 = vset.pattern.permute.xlu0 0
        %1063 = vperm.xlu0 %1062, %v1045
        %v1064 = vpop.permute.xlu0 %1063
        %1067 = vset.pattern.permute.xlu0 0
        %1068 = vperm.xlu0 %1067, %v1046
        %v1069 = vpop.permute.xlu0 %1068
        %1072 = vset.pattern.permute.xlu0 0
        %1073 = vperm.xlu0 %1072, %v1047
        %v1074 = vpop.permute.xlu0 %1073
        %1077 = vset.pattern.permute.xlu0 0
        %1078 = vperm.xlu0 %1077, %v1048
        %v1079 = vpop.permute.xlu0 %1078
        %v1081 = vmul.f32 %v1064, %v1023
        %v1082 = vmul.f32 %v1069, %v1024
        %v1083 = vmul.f32 %v1074, %v1025
        %v1084 = vmul.f32 %v1079, %v1026
        %v1085 = vadd.f32 %v1081, %v1082
        %v1086 = vadd.f32 %v1085, %v1083
        %v1087 = vadd.f32 %v1086, %v1084
        %v1088 = vrot.slane %v1087, 4
        %v1089 = vadd.f32 %v1087, %v1088
        %v1090 = vrot.slane %v1089, 2
        %v1091 = vadd.f32 %v1089, %v1090
        %v1092 = vrot.slane %v1091, 1
        %v1093 = vadd.f32 %v1091, %v1092
        %1095 = vset.pattern.permute.xlu0 0
        %1096 = vperm.xlu0 %1095, %v1028
        %v1097 = vpop.permute.xlu0 %1096
        %v1099 = vlaneseq
        %v1100 = vshrl.u32 %v1099, 7
        %v1101 = vsub.s32 0, %v1100
        %v1102 = vrot.slane %v1097, %v1101
        %v1103 = vadd.f32 %v1093, %v1102
        %1104 = vst [vmem:[%s270] sm:$0x1] %v1103
        %s1105 = sand.u32 %s183, 1
        %s1106 = scalar_lea.sflag [#allocation4], %s1105
        %s1107 = sand.u32 %s183, 1
        %s1108 = scalar_lea.vmem [#allocation3], %s1107
        // Predicated region
        $region49: #{tpu_custom_call.1} parent=47 // pred_check
          %p1109 = pneg %p193
        $region50: #{tpu_custom_call.1} parent=47 // pred_check_branch
          %1111 = sbr.rel (%p1109) target = $region52
        $region51: #{tpu_custom_call.1} parent=47 // pred_region
          %s1113 = ssub.s32 16, 16
          %1114 = vsyncadd %s1106, %s1113
          %s1115 = smul.addr %s23, 16
          %s1116 = scalar_lea.hbm %s7, %s1115
          %s1118 = sshll.u32 %s1108, 4
          %s1119 = int_to_ptr.vmem [resolvable:$true] %s1118
          %1121 = dma.vmem_to_hbm [thread:$0]  %s1119, 16, %s1116, %s1106
        $region52: #{tpu_custom_call.1} parent=47 // pred_fallthru
          _
      $region48: #{tpu_custom_call.1} parent=5 // pred_fallthru
        _
      %p1122 = scmp.le.s32.totalorder 2, %s18
      // Predicated region
      $region53: #{tpu_custom_call.1} parent=5 // pred_check
        %p1123 = pneg %p1122
      $region54: #{tpu_custom_call.1} parent=5 // pred_check_branch
        %1125 = sbr.rel (%p1123) target = $region56
      $region55: #{tpu_custom_call.1} parent=5 // pred_region
        %s1126 = ssub.s32 %s18, 2
        // Predicated region
        $region57: #{tpu_custom_call.1} parent=55 // pred_check
          %p1127 = pneg %p199
        $region58: #{tpu_custom_call.1} parent=55 // pred_check_branch
          %1129 = sbr.rel (%p1127) target = $region60
        $region59: #{tpu_custom_call.1} parent=55 // pred_region
          %s1130 = sand.u32 %s184, 1
          %s1131 = scalar_lea.sflag [#allocation4], %s1130
          %s1132 = sand.u32 %s184, 1
          %s1133 = scalar_lea.vmem [#allocation3], %s1132
          %1134 = dma.done %s1131, 16
        $region60: #{tpu_custom_call.1} parent=55 // pred_fallthru
          _
      $region56: #{tpu_custom_call.1} parent=5 // pred_fallthru
        _
    $region6: #{tpu_custom_call.1} parent=1 // loop_footer
      %s22 = sadd.s32 1, %s18
    $region7: #{tpu_custom_call.1} parent=1 // loop_footer_branch
      %17 = sbr.rel target = $region3
    $region8: #{tpu_custom_call.1} parent=1 // loop_exit
      _
    %1135 = vsyncpa [#allocation4], 1
    %s1136 = scalar_lea.sflag [#allocation4], 1
    %1137 = vsyncpa %s1136, 1

</llo_original>
